<compile_context>
chip_gen: v7x
topology: tpu7x:2x2x1
jax: 0.10.0
libtpu: 0.0.40
codegen_flags: <defaults>
</compile_context>

<pallas_src>
import functools
import math

import jax
import jax.numpy as jnp
from jax.experimental import pallas as pl
from jax.experimental.pallas import tpu as pltpu


def _label_smoothing_kernel(pred_ref, tgt_ref, out_ref, *,
                            on_val, off_val, row_const, pad_idx,
                            n_rows, vocab, tile_rows, tile_v, col_mask_needed):
    i = pl.program_id(0)          # row tile
    j = pl.program_id(1)          # vocab tile (reduction axis, last)

    pred = pred_ref[...].astype(jnp.float32)                    # (TN, TV) f32
    tgt = tgt_ref[...]                                          # (TN, 1) int32
    tn, tv = pred.shape

    # Row validity: real row (ragged N, no wrapper pad) and target != pad_idx.
    row = jax.lax.broadcasted_iota(jnp.int32, (tn, 1), 0) + i * tile_rows
    valid = jnp.logical_and(tgt != pad_idx, row < n_rows)       # (TN, 1) bool

    # Global column ids for this V tile.
    col = jax.lax.broadcasted_iota(jnp.int32, (tn, tv), 1) + j * tile_v

    # sum_v pred over this tile; mask trailing garbage lanes only if needed.
    if col_mask_needed:
        tot = jnp.sum(jnp.where(col < vocab, pred, 0.0), axis=-1, keepdims=True)
    else:
        tot = jnp.sum(pred, axis=-1, keepdims=True)              # (TN, 1)

    # pred at the target column (0 if the target is not in this V tile).
    hit = jnp.sum(jnp.where(col == tgt, pred, 0.0), axis=-1, keepdims=True)

    # pred at the pad column: static lane slice straight from the ref; scaled
    # to zero for every V tile except the one containing pad_idx.
    local_pad = pad_idx % tile_v
    pad_tile = pad_idx // tile_v
    p_pad = pred_ref[:, local_pad:local_pad + 1].astype(jnp.float32)   # (TN, 1)
    pad_scale = jnp.where(j == pad_tile, jnp.float32(off_val), jnp.float32(0.0))

    # Per-row contribution of this V tile to   sum_v dist * pred.
    cross = (jnp.float32(off_val) * tot
             + jnp.float32(on_val - off_val) * hit
             - pad_scale * p_pad)                                # (TN, 1)

    tile_sum = jnp.sum(jnp.where(valid, cross, 0.0))             # scalar

    @pl.when(j == 0)
    def _():
        # Initialize this row tile's accumulator with the closed-form
        # sum_v dist*log(dist) term (row_const per valid row).
        n_valid = jnp.sum(jnp.where(valid, jnp.float32(1.0), jnp.float32(0.0)))
        out_ref[...] = (jnp.float32(row_const) * n_valid).reshape(1, 1, 1)

    out_ref[...] = out_ref[...] - tile_sum.reshape(1, 1, 1)


def _vmem_capacity_bytes():
    """Physical VMEM per TensorCore (generation aware), with a safe fallback."""
    try:
        info = pltpu.get_tpu_info()
        cap = getattr(info, "vmem_capacity_bytes", None)
        if cap:
            return int(cap)
    except Exception:
        pass
    return 64 << 20   # conservative (v7x-sized)


def _ceil_to(x, m):
    return -(-x // m) * m


def label_smoothing_loss(pred, target, *, smoothing, pad_idx,
                         tile_rows=None, tile_v=None):
    """Pallas implementation of LabelSmoothing.forward (returns scalar f32)."""
    B, S, V = pred.shape
    assert V > 2, "smoothing/(V-2) requires V > 2 (matches the PyTorch module)"
    N = B * S
    itemsize = jnp.dtype(pred.dtype).itemsize
    # Dtype-correct sublane multiple: f32 -> 8, bf16 -> 16, int8/fp8 -> 32.
    sublane = max(8, 32 // itemsize)

    # Generation-aware VMEM budgeting (v5e/v6e: 128 MiB phys, v7x: 64 MiB).
    cap = _vmem_capacity_bytes()
    vmem_limit = int(min(3 * cap // 4, 96 << 20))
    target_bytes = int(max(2 << 20, min(6 << 20, vmem_limit // 16)))

    # Vocab tiling: full V if a minimum-height block fits the budget, else
    # lane-aligned tiles (handles huge-vocab LLM heads).
    if tile_v is None:
        if sublane * V * itemsize <= target_bytes:
            tile_v = V
        else:
            tile_v = max(128, (target_bytes // (sublane * itemsize)) // 128 * 128)
            tile_v = min(tile_v, max(128, (V // 128) * 128))
    tile_v = int(tile_v)

    # Row tiling: biggest sublane-multiple block that fits the per-block budget.
    if tile_rows is None:
        tile_rows = max(sublane, min(4096, target_bytes // max(1, tile_v * itemsize)))
        tile_rows -= tile_rows % sublane
        tile_rows = max(sublane, tile_rows)
        tile_rows = min(tile_rows, max(sublane, _ceil_to(N, sublane)))
        # Prefer an even number of row tiles (balances v7x's two TensorCores).
        num = -(-N // tile_rows)
        if num > 1 and num % 2 == 1:
            alt = _ceil_to(-(-N // (num + 1)), sublane)
            if alt >= sublane and (-(-N // alt)) % 2 == 0:
                tile_rows = alt
    tile_rows = int(tile_rows)
    assert tile_rows % sublane == 0

    num_row_tiles = -(-N // tile_rows)
    num_v_tiles = -(-V // tile_v)
    col_mask_needed = (V % tile_v) != 0

    # No wrapper-side padding of pred: ragged rows are masked inside the kernel.
    pred2 = pred.reshape(N, V)
    tgt2 = target.reshape(N, 1).astype(jnp.int32)

    # Compile-time constants (no log inside the kernel).
    on_val = 1.0 - float(smoothing)
    off_val = float(smoothing) / (V - 2)
    row_const = 0.0
    if on_val > 0.0:
        row_const += on_val * math.log(on_val)
    if off_val > 0.0:
        row_const += (V - 2) * off_val * math.log(off_val)

    kernel = functools.partial(
        _label_smoothing_kernel,
        on_val=on_val, off_val=off_val, row_const=row_const,
        pad_idx=int(pad_idx), n_rows=N, vocab=V,
        tile_rows=tile_rows, tile_v=tile_v, col_mask_needed=col_mask_needed,
    )

    cost = pl.CostEstimate(
        flops=4 * N * V,
        transcendentals=0,
        bytes_accessed=N * V * itemsize + N * 4 + num_row_tiles * 4,
    )

    partials = pl.pallas_call(
        kernel,
        out_shape=jax.ShapeDtypeStruct((num_row_tiles, 1, 1), jnp.float32),
        grid=(num_row_tiles, num_v_tiles),
        in_specs=[
            pl.BlockSpec((tile_rows, tile_v), lambda i, j: (i, j)),
            pl.BlockSpec((tile_rows, 1), lambda i, j: (i, 0)),
        ],
        out_specs=pl.BlockSpec((1, 1, 1), lambda i, j: (i, 0, 0)),
        compiler_params=pltpu.CompilerParams(
            dimension_semantics=("parallel", "arbitrary"),
            vmem_limit_bytes=vmem_limit,
        ),
        cost_estimate=cost,
    )(pred2, tgt2)

    return jnp.sum(partials)


def _reference_loss(pred, target, *, smoothing, pad_idx):
    """Pure-JAX reference matching the PyTorch module exactly."""
    B, S, V = pred.shape
    p = pred.reshape(-1, V).astype(jnp.float32)
    t = target.reshape(-1)
    n = p.shape[0]
    dist = jnp.full((n, V), smoothing / (V - 2), dtype=jnp.float32)
    dist = dist.at[jnp.arange(n), t].set(1.0 - smoothing)
    dist = dist.at[:, pad_idx].set(0.0)
    dist = jnp.where((t == pad_idx)[:, None], 0.0, dist)
    term = jnp.where(dist > 0.0,
                     dist * (jnp.log(jnp.where(dist > 0.0, dist, 1.0)) - p),
                     0.0)
    return jnp.sum(term)


if __name__ == "__main__":
    key = jax.random.PRNGKey(0)
    smoothing = 0.1
    pad_idx = 0
    k1, k2, k3, k4, k5, k6 = jax.random.split(key, 6)

    # Test 1: small f32 (B, S, V), single row tile, single V tile.
    B, S, V = 2, 8, 32
    logits = jax.random.normal(k1, (B, S, V), dtype=jnp.float32)
    pred = jax.nn.log_softmax(logits, axis=-1)
    target = jax.random.randint(k2, (B, S), 0, V, dtype=jnp.int32)
    target = target.at[0, 0].set(pad_idx).at[1, 3].set(pad_idx)

    loss = jax.block_until_ready(
        label_smoothing_loss(pred, target, smoothing=smoothing, pad_idx=pad_idx))
    ref = _reference_loss(pred, target, smoothing=smoothing, pad_idx=pad_idx)
    assert jnp.allclose(loss, ref, rtol=1e-5, atol=1e-3), (loss, ref)

    # Test 2: f32, multiple row tiles with a ragged last tile (no wrapper pad)
    # and two V tiles (exercises the V-axis reduction + accumulator path).
    B2, S2, V2 = 3, 13, 256            # N = 39 rows -> 3 row tiles of 16
    logits2 = jax.random.normal(k3, (B2, S2, V2), dtype=jnp.float32)
    pred2 = jax.nn.log_softmax(logits2, axis=-1)
    target2 = jax.random.randint(k4, (B2, S2), 0, V2, dtype=jnp.int32)
    target2 = target2.at[0, 0].set(pad_idx).at[2, 5].set(pad_idx)

    loss2 = jax.block_until_ready(
        label_smoothing_loss(pred2, target2, smoothing=smoothing, pad_idx=pad_idx,
                             tile_rows=16, tile_v=128))
    ref2 = _reference_loss(pred2, target2, smoothing=smoothing, pad_idx=pad_idx)
    assert jnp.allclose(loss2, ref2, rtol=1e-5, atol=1e-3), (loss2, ref2)

    # Test 3: bf16 pred streamed from HBM (half the bytes), partial last V tile
    # (V % tile_v != 0 exercises the column-validity mask), f32 accumulation.
    B3, S3, V3 = 2, 16, 160
    logits3 = jax.random.normal(k5, (B3, S3, V3), dtype=jnp.float32)
    pred3 = jax.nn.log_softmax(logits3, axis=-1).astype(jnp.bfloat16)
    target3 = jax.random.randint(k6, (B3, S3), 0, V3, dtype=jnp.int32)
    target3 = target3.at[0, 2].set(pad_idx).at[1, 7].set(pad_idx)

    loss3 = jax.block_until_ready(
        label_smoothing_loss(pred3, target3, smoothing=smoothing, pad_idx=pad_idx,
                             tile_rows=16, tile_v=128))
    ref3 = _reference_loss(pred3, target3, smoothing=smoothing, pad_idx=pad_idx)
    assert jnp.allclose(loss3, ref3, rtol=1e-4, atol=1e-2), (loss3, ref3)

    print("KERNEL_OK")
</pallas_src>

<mosaic_0001>
module attributes {stable_mosaic.version = 11 : i64} {
  func.func @_label_smoothing_kernel(%arg0: i32, %arg1: i32, %arg2: memref<16x32xf32, #tpu.memory_space<vmem>>, %arg3: memref<16x1xi32, #tpu.memory_space<vmem>>, %arg4: memref<1x1x1xf32, #tpu.memory_space<vmem>>) attributes {dimension_semantics = [#tpu.dimension_semantics<parallel>, #tpu.dimension_semantics<arbitrary>], iteration_bounds = array<i64: 1, 1>, scalar_prefetch = 0 : i64, scratch_operands = 0 : i64, tpu.core_type = #tpu.core_type<tc>, window_params = [{transform_indices = @transform_0, window_bounds = array<i64: 16, 32>}, {transform_indices = @transform_1, window_bounds = array<i64: 16, 1>}, {transform_indices = @transform_2, window_bounds = array<i64: 1, 1, 1>}]} {
    %c0 = arith.constant 0 : index
    %c0_0 = arith.constant 0 : index
    %0 = vector.load %arg2[%c0, %c0_0] : memref<16x32xf32, #tpu.memory_space<vmem>>, vector<16x32xf32>
    %c0_1 = arith.constant 0 : index
    %c0_2 = arith.constant 0 : index
    %1 = vector.load %arg3[%c0_1, %c0_2] : memref<16x1xi32, #tpu.memory_space<vmem>>, vector<16x1xi32>
    %2 = tpu.iota {dimensions = array<i32: 0>} : vector<16x1xi32>
    %c16_i32 = arith.constant 16 : i32
    %3 = arith.muli %arg0, %c16_i32 : i32
    %4 = vector.broadcast %3 : i32 to vector<16x1xi32>
    %5 = arith.addi %2, %4 : vector<16x1xi32>
    %c0_i32 = arith.constant 0 : i32
    %6 = vector.broadcast %c0_i32 : i32 to vector<16x1xi32>
    %7 = arith.cmpi ne, %1, %6 : vector<16x1xi32>
    %c16_i32_3 = arith.constant 16 : i32
    %8 = vector.broadcast %c16_i32_3 : i32 to vector<16x1xi32>
    %9 = arith.cmpi slt, %5, %8 : vector<16x1xi32>
    %10 = arith.andi %7, %9 : vector<16x1xi1>
    %11 = tpu.iota {dimensions = array<i32: 1>} : vector<16x32xi32>
    %c32_i32 = arith.constant 32 : i32
    %12 = arith.muli %arg1, %c32_i32 : i32
    %13 = vector.broadcast %12 : i32 to vector<16x32xi32>
    %14 = arith.addi %11, %13 : vector<16x32xi32>
    %cst = arith.constant dense<0.000000e+00> : vector<16xf32>
    %15 = vector.multi_reduction <add>, %0, %cst [1] : vector<16x32xf32> to vector<16xf32>
    %16 = vector.shape_cast %15 : vector<16xf32> to vector<16x1xf32>
    %17 = vector.broadcast %1 : vector<16x1xi32> to vector<16x32xi32>
    %18 = arith.cmpi eq, %14, %17 : vector<16x32xi32>
    %cst_4 = arith.constant 0.000000e+00 : f32
    %19 = vector.broadcast %cst_4 : f32 to vector<16x32xf32>
    %20 = arith.select %18, %0, %19 : vector<16x32xi1>, vector<16x32xf32>
    %cst_5 = arith.constant dense<0.000000e+00> : vector<16xf32>
    %21 = vector.multi_reduction <add>, %20, %cst_5 [1] : vector<16x32xf32> to vector<16xf32>
    %22 = vector.shape_cast %21 : vector<16xf32> to vector<16x1xf32>
    %c0_6 = arith.constant 0 : index
    %c0_7 = arith.constant 0 : index
    %23 = vector.load %arg2[%c0_6, %c0_7] : memref<16x32xf32, #tpu.memory_space<vmem>>, vector<16x1xf32>
    %c0_i32_8 = arith.constant 0 : i32
    %24 = arith.cmpi eq, %arg1, %c0_i32_8 : i32
    %cst_9 = arith.constant 0.00333333341 : f32
    %cst_10 = arith.constant 0.000000e+00 : f32
    %25 = arith.select %24, %cst_9, %cst_10 : f32
    %cst_11 = arith.constant 0.00333333341 : f32
    %26 = vector.broadcast %cst_11 : f32 to vector<16x1xf32>
    %27 = arith.mulf %26, %16 : vector<16x1xf32>
    %cst_12 = arith.constant 0.896666646 : f32
    %28 = vector.broadcast %cst_12 : f32 to vector<16x1xf32>
    %29 = arith.mulf %28, %22 : vector<16x1xf32>
    %30 = arith.addf %27, %29 : vector<16x1xf32>
    %31 = vector.broadcast %25 : f32 to vector<16x1xf32>
    %32 = arith.mulf %31, %23 : vector<16x1xf32>
    %33 = arith.subf %30, %32 : vector<16x1xf32>
    %cst_13 = arith.constant 0.000000e+00 : f32
    %34 = vector.broadcast %cst_13 : f32 to vector<16x1xf32>
    %35 = arith.select %10, %33, %34 : vector<16x1xi1>, vector<16x1xf32>
    %36 = vector.shape_cast %35 : vector<16x1xf32> to vector<1x16x1xf32>
    %cst_14 = arith.constant dense<0.000000e+00> : vector<1xf32>
    %37 = vector.multi_reduction <add>, %36, %cst_14 [1, 2] : vector<1x16x1xf32> to vector<1xf32>
    %38 = vector.shape_cast %37 : vector<1xf32> to vector<1x1x1xf32>
    %39 = vector.extract %38[0, 0, 0] : f32 from vector<1x1x1xf32>
    %c0_i32_15 = arith.constant 0 : i32
    %40 = arith.cmpi eq, %arg1, %c0_i32_15 : i32
    %41 = arith.extui %40 : i1 to i32
    %c0_i32_16 = arith.constant 0 : i32
    %42 = arith.cmpi ne, %41, %c0_i32_16 : i32
    scf.if %42 {
      %cst_23 = arith.constant 1.000000e+00 : f32
      %cst_24 = arith.constant 0.000000e+00 : f32
      %47 = vector.broadcast %cst_23 : f32 to vector<16x1xf32>
      %48 = vector.broadcast %cst_24 : f32 to vector<16x1xf32>
      %49 = arith.select %10, %47, %48 : vector<16x1xi1>, vector<16x1xf32>
      %50 = vector.shape_cast %49 : vector<16x1xf32> to vector<1x16x1xf32>
      %cst_25 = arith.constant dense<0.000000e+00> : vector<1xf32>
      %51 = vector.multi_reduction <add>, %50, %cst_25 [1, 2] : vector<1x16x1xf32> to vector<1xf32>
      %52 = vector.shape_cast %51 : vector<1xf32> to vector<1x1x1xf32>
      %53 = vector.extract %52[0, 0, 0] : f32 from vector<1x1x1xf32>
      %cst_26 = arith.constant -0.665202737 : f32
      %54 = arith.mulf %cst_26, %53 : f32
      %55 = vector.broadcast %54 : f32 to vector<1x1x1xf32>
      %c0_27 = arith.constant 0 : index
      %c0_28 = arith.constant 0 : index
      %c0_29 = arith.constant 0 : index
      %56 = vector.load %arg4[%c0_27, %c0_28, %c0_29] : memref<1x1x1xf32, #tpu.memory_space<vmem>>, vector<1x1x1xf32>
      tpu.vector_store %arg4[%c0_27, %c0_28, %c0_29], %55 {strides = array<i32>} : memref<1x1x1xf32, #tpu.memory_space<vmem>>, vector<1x1x1xf32>,
    } else {
    }
    %c0_17 = arith.constant 0 : index
    %c0_18 = arith.constant 0 : index
    %c0_19 = arith.constant 0 : index
    %43 = vector.load %arg4[%c0_17, %c0_18, %c0_19] : memref<1x1x1xf32, #tpu.memory_space<vmem>>, vector<1x1x1xf32>
    %44 = vector.broadcast %39 : f32 to vector<1x1x1xf32>
    %45 = arith.subf %43, %44 : vector<1x1x1xf32>
    %c0_20 = arith.constant 0 : index
    %c0_21 = arith.constant 0 : index
    %c0_22 = arith.constant 0 : index
    %46 = vector.load %arg4[%c0_20, %c0_21, %c0_22] : memref<1x1x1xf32, #tpu.memory_space<vmem>>, vector<1x1x1xf32>
    tpu.vector_store %arg4[%c0_20, %c0_21, %c0_22], %45 {strides = array<i32>} : memref<1x1x1xf32, #tpu.memory_space<vmem>>, vector<1x1x1xf32>,
    return
  }
  func.func @transform_0(%arg0: i32, %arg1: i32) -> (i32, i32) {
    %c0_i32 = arith.constant 0 : i32
    return %arg0, %arg1 : i32, i32
  }
  func.func @transform_1(%arg0: i32, %arg1: i32) -> (i32, i32) {
    %c0_i32 = arith.constant 0 : i32
    %c0_i32_0 = arith.constant 0 : i32
    return %arg0, %c0_i32 : i32, i32
  }
  func.func @transform_2(%arg0: i32, %arg1: i32) -> (i32, i32, i32) {
    %c0_i32 = arith.constant 0 : i32
    %c0_i32_0 = arith.constant 0 : i32
    %c0_i32_1 = arith.constant 0 : i32
    return %arg0, %c0_i32, %c0_i32_0 : i32, i32, i32
  }
}

</mosaic_0001>

<llo_original>
// kernel: tpu_custom_call.1
$region0: #{tpu_custom_call.1}
  #allocation0 [shape = 'u32[]', space=smem, size = 0x4, offset = 0x4, fixed_abs, tag = 'smem constant byte address 0x4 - core index']
  #allocation1 [shape = 'u32[144,128]{1,0:T(1,128)}', space=vmem, size = 0x12000, scoped, tag = 'internal scratch']
  %s0 = inlined_call_operand.vmem [shape: f32[16,32], index: 0, kind: input, shape index: {}]
  %s1 = inlined_call_operand.vmem [shape: s32[16,1], index: 1, kind: input, shape index: {}]
  %s2 = inlined_call_operand.hbm [shape: f32[1,1,1], index: 2, kind: output, shape index: {}]
  %s3 = sld [smem:[#allocation0]]
  $region22: #{tpu_custom_call.1} parent=0
    _
  %s5 = ssub.s32 1, %s3
  %s6 = scalar_select 0, %s5, %s3
  $region1: #{tpu_custom_call.1} parent=0
    #allocation2 [shape = 'u8[512]{0}', space=vmem, size = 0x400, scoped, tag = 'output window, operand 0, single buffered']
    #allocation3 [shape = 's32[1]{0}', space=sflag, size = 0x4, scoped, tag = 'scoped memory for tpu_custom_call.1']
    %7 = vsyncpa [#allocation3], 0
    // Predicated region
    $region2: #{tpu_custom_call.1} parent=1 // pred_check
      _
    $region3: #{tpu_custom_call.1} parent=1 // pred_check_branch
      %9 = sbr.rel (0) target = $region5
    $region4: #{tpu_custom_call.1} parent=1 // pred_region
      _
    $region5: #{tpu_custom_call.1} parent=1 // pred_fallthru
      _
    // Predicated region
    $region6: #{tpu_custom_call.1} parent=1 // pred_check
      _
    $region7: #{tpu_custom_call.1} parent=1 // pred_check_branch
      %11 = sbr.rel (0) target = $region9
    $region8: #{tpu_custom_call.1} parent=1 // pred_region
      _
    $region9: #{tpu_custom_call.1} parent=1 // pred_fallthru
      _
    %v12 = vld [vmem:[%s0] sm:$0xff]
    %v13 = vld [vmem:[%s0 + $0x8] sm:$0xff]
    %v14 = vld [vmem:[%s1] sm:$0xff]
    %v15 = vld [vmem:[%s1 + $0x8] sm:$0xff]
    %v16 = vlaneseq
    %v17 = vshrl.u32 %v16, 7
    %v18 = vadd.s32 %v17, 8
    %s19 = smul.u32 0, 16
    %v20 = vstv %s19
    %v21 = vadd.s32 %v17, %v20
    %v22 = vadd.s32 %v18, %v20
    %vm23 = vcmp.ne.s32.totalorder %v14, 0
    %vm24 = vcmp.ne.s32.totalorder %v15, 0
    %vm25 = vcmp.lt.s32.totalorder %v21, 16
    %vm26 = vcmp.lt.s32.totalorder %v22, 16
    %vm27 = vmand %vm23, %vm25
    %vm28 = vmand %vm24, %vm26
    %v29 = vlaneseq
    %v30 = vand.u32 %v29, 127
    %s31 = smul.u32 0, 32
    %v32 = vstv %s31
    %v33 = vadd.s32 %v30, %v32
    %vm34 = vcmask 261120
    %v35 = vsel %vm34, %v12, 0.0
    %36 = vadd.xlane.f32.xlu0 %v35
    %v37 = vpop.xlane.xlu0 %36
    %v38 = vsel %vm34, %v13, 0.0
    %39 = vadd.xlane.f32.xlu0 %v38
    %v40 = vpop.xlane.xlu0 %39
    %41 = vset.pattern.permute.xlu0 0
    %42 = vperm.xlu0 %41, %v14
    %v43 = vpop.permute.xlu0 %42
    %44 = vset.pattern.permute.xlu0 0
    %45 = vperm.xlu0 %44, %v15
    %v46 = vpop.permute.xlu0 %45
    %vm47 = vcmp.eq.s32.totalorder %v33, %v43
    %vm48 = vcmp.eq.s32.totalorder %v33, %v46
    %v49 = vsel %vm47, %v12, 0.0
    %v50 = vsel %vm48, %v13, 0.0
    %v51 = vsel %vm34, %v49, 0.0
    %52 = vadd.xlane.f32.xlu0 %v51
    %v53 = vpop.xlane.xlu0 %52
    %v54 = vsel %vm34, %v50, 0.0
    %55 = vadd.xlane.f32.xlu0 %v54
    %v56 = vpop.xlane.xlu0 %55
    %p57 = scmp.eq.s32.totalorder 0, 0
    %s58 = scalar_select %p57, 0.0033333334, 0.0
    %v59 = vmul.f32 %v37, 0.0033333334
    %v60 = vmul.f32 %v40, 0.0033333334
    %v61 = vmul.f32 %v53, 0.89666665
    %v62 = vmul.f32 %v56, 0.89666665
    %v63 = vadd.f32 %v59, %v61
    %v64 = vadd.f32 %v60, %v62
    %v65 = vstv %s58
    %v66 = vmul.f32 %v65, %v12
    %v67 = vmul.f32 %v65, %v13
    %v68 = vsub.f32 %v63, %v66
    %v69 = vsub.f32 %v64, %v67
    %v70 = vsel %vm27, %v68, 0.0
    %v71 = vsel %vm28, %v69, 0.0
    %vm72 = vcmask 7168
    %v73 = vsel %vm72, %v70, 0.0
    %v74 = vsel %vm72, %v71, 0.0
    %v75 = vadd.f32 %v73, %v74
    %76 = vadd.xlane.f32.xlu0 %v75
    %v77 = vpop.xlane.xlu0 %76
    %v78 = vrot.slane %v77, 4
    %v79 = vadd.f32 %v77, %v78
    %v80 = vrot.slane %v79, 2
    %v81 = vadd.f32 %v79, %v80
    %v82 = vrot.slane %v81, 1
    %v83 = vadd.f32 %v81, %v82
    %s84 = vtos %v83
    // Predicated region
    $region10: #{tpu_custom_call.1} parent=1 // pred_check
      %p85 = pneg %p57
    $region11: #{tpu_custom_call.1} parent=1 // pred_check_branch
      %87 = sbr.rel (%p85) target = $region13
    $region12: #{tpu_custom_call.1} parent=1 // pred_region
      %v88 = vsel %vm27, 1.0, 0.0
      %v89 = vsel %vm28, 1.0, 0.0
      %v90 = vsel %vm72, %v88, 0.0
      %v91 = vsel %vm72, %v89, 0.0
      %v92 = vadd.f32 %v90, %v91
      %93 = vadd.xlane.f32.xlu0 %v92
      %v94 = vpop.xlane.xlu0 %93
      %v95 = vrot.slane %v94, 4
      %v96 = vadd.f32 %v94, %v95
      %v97 = vrot.slane %v96, 2
      %v98 = vadd.f32 %v96, %v97
      %v99 = vrot.slane %v98, 1
      %v100 = vadd.f32 %v98, %v99
      %s101 = vtos %v100
      %s102 = smul.f32 %s101, -0.66520274
      %v103 = vstv %s102
      %vm104 = vcmask 0
      %105 = vst.msk [vmem:[#allocation2] sm:$0x1] %vm104, %v103
    $region13: #{tpu_custom_call.1} parent=1 // pred_fallthru
      _
    %v106 = vld [vmem:[#allocation2] sm:$0x1]
    %v107 = vstv %s84
    %v108 = vsub.f32 %v106, %v107
    %vm109 = vcmask 0
    %110 = vst.msk [vmem:[#allocation2] sm:$0x1] %vm109, %v108
    // Predicated region
    $region14: #{tpu_custom_call.1} parent=1 // pred_check
      _
    $region15: #{tpu_custom_call.1} parent=1 // pred_check_branch
      %112 = sbr.rel (0) target = $region17
    $region16: #{tpu_custom_call.1} parent=1 // pred_region
      %s114 = ssub.s32 16, 16
      %115 = vsyncadd [#allocation3], %s114
      %s117 = sshll.u32 [#allocation2], 4
      %s118 = int_to_ptr.vmem [resolvable:$true] %s117
      %120 = dma.vmem_to_hbm [thread:$0]  %s118, 16, %s2, [#allocation3]
    $region17: #{tpu_custom_call.1} parent=1 // pred_fallthru
      _
    // Predicated region
    $region18: #{tpu_custom_call.1} parent=1 // pred_check
      _
    $region19: #{tpu_custom_call.1} parent=1 // pred_check_branch
      %122 = sbr.rel (0) target = $region21
    $region20: #{tpu_custom_call.1} parent=1 // pred_region
      %123 = dma.done [#allocation3], 16
    $region21: #{tpu_custom_call.1} parent=1 // pred_fallthru
      _
    %124 = vsyncpa [#allocation3], 1

</llo_original>
